<compile_context>
chip_gen: v6e
topology: v6e:2x2x1
jax: 0.10.0
libtpu: 0.0.40
codegen_flags: <defaults>
</compile_context>

<pallas_src>
import jax
import jax.numpy as jnp
import numpy as np
from jax.experimental import pallas as pl
from jax.experimental.pallas import tpu as pltpu


def _make_single_layer_kernel(N, C, G, H, W, eps):
    HW = H * W
    KC = 9 * C          # im2col contraction size
    PAD = W + 1         # flat zero-pad so every 3x3 tap is a static lane window

    def kernel(x_ref, gb_ref, wb_ref, o_ref):
        # x_ref : (N, C, HW)       input (NCHW flattened), channels on sublanes
        # gb_ref: (C, 2)           [:, 0] = gamma, [:, 1] = beta            (f32)
        # wb_ref: (G, 9*C + 1)     [:, :9C] im2col weights, [:, 9C:] bias   (f32)
        # o_ref : (N, C+G, HW)     concat([x, conv(relu(bn(x)))], channel)
        f32 = jnp.float32

        xs = [x_ref[n].astype(f32) for n in range(N)]           # N x (C, HW)

        # ---- BatchNorm2d (training mode): batch stats over (N, H, W), biased var ----
        inv_cnt = 1.0 / float(N * HW)
        s = xs[0]
        for n in range(1, N):
            s = s + xs[n]
        mean = jnp.sum(s, axis=1, keepdims=True) * inv_cnt       # (C, 1)
        v = jnp.zeros((C, HW), f32)
        for xn in xs:
            d = xn - mean
            v = v + d * d
        var = jnp.sum(v, axis=1, keepdims=True) * inv_cnt        # (C, 1)

        gb = gb_ref[...]                                          # (C, 2) f32
        gamma = gb[:, 0:1]
        beta = gb[:, 1:2]
        scale = gamma * jax.lax.rsqrt(var + eps)                  # (C, 1)
        shift = beta - mean * scale                               # (C, 1)

        wb = wb_ref[...]                                          # (G, 9C+1) f32
        w_im2col = wb[:, 0:KC]                                    # (G, 9C)
        bias = wb[:, KC:KC + 1]                                   # (G, 1)

        # ---- left/right column masks for the 3x3 taps (flat spatial index on lanes) ----
        pos = jax.lax.broadcasted_iota(jnp.int32, (1, HW), 1)
        col = jnp.bitwise_and(pos, W - 1) if (W & (W - 1)) == 0 else pos % W
        w_ok = [col >= 1, None, col <= W - 2]                     # dw = 0, 1, 2

        zpad = jnp.zeros((C, PAD), f32)

        for n in range(N):
            xn = xs[n]                                            # (C, HW)
            y = jnp.maximum(xn * scale + shift, 0.0)              # BN + ReLU

            # Zero-pad the flattened spatial axis once; every tap of the 3x3 conv is
            # then a static lane window of this (C, HW + 2W + 2) block.  Row (H)
            # boundaries fall into the pad automatically; only the W boundaries
            # need a mask.
            ypad = jnp.concatenate([zpad, y, zpad], axis=1)       # (C, HW + 2W + 2)

            cols = []
            for dh in range(3):
                for dw in range(3):
                    off = PAD + (dh - 1) * W + (dw - 1)
                    yt = ypad[:, off:off + HW]                    # (C, HW)
                    if w_ok[dw] is not None:
                        yt = jnp.where(w_ok[dw], yt, 0.0)
                    cols.append(yt)
            ycol = jnp.concatenate(cols, axis=0)                  # (9C, HW)

            # One MXU matmul for the whole 3x3 conv of this batch element.
            conv = jnp.dot(w_im2col, ycol,
                           preferred_element_type=jnp.float32) + bias   # (G, HW)

            # torch.cat([x, out], dim=1), written lane-dense straight from the kernel.
            o_ref[n, 0:C, :] = xn.astype(o_ref.dtype)
            o_ref[n, C:C + G, :] = conv.astype(o_ref.dtype)

    return kernel


def single_layer_forward(x_nchw, gamma, beta, conv_w_hwio, conv_b, eps=1e-5):
    """SingleLayer forward in native NCHW: concat([x, conv(relu(bn(x)))], dim=1)."""
    N, C, H, W = x_nchw.shape
    G = conv_w_hwio.shape[-1]
    HW = H * W

    x_flat = x_nchw.reshape(N, C, HW)                             # free, contiguous

    # Pack the tiny per-channel parameters into two small f32 operands (fewer DMAs,
    # BN/bias math kept in f32 regardless of the activation dtype).
    gb = jnp.stack([gamma, beta], axis=1).astype(jnp.float32)                     # (C, 2)
    w_gk = jnp.transpose(conv_w_hwio, (3, 0, 1, 2)).reshape(G, 9 * C)             # (G, 9C)
    wb = jnp.concatenate([w_gk.astype(jnp.float32),
                          conv_b.reshape(G, 1).astype(jnp.float32)], axis=1)      # (G, 9C+1)

    kernel = _make_single_layer_kernel(N, C, G, H, W, eps)

    out_flat = pl.pallas_call(
        kernel,
        out_shape=jax.ShapeDtypeStruct((N, C + G, HW), x_nchw.dtype),
        grid_spec=pltpu.PrefetchScalarGridSpec(
            num_scalar_prefetch=0,
            grid=(1,),                                            # whole problem is ~32 KB
            in_specs=[
                pl.BlockSpec((N, C, HW), lambda i: (0, 0, 0)),
                pl.BlockSpec((C, 2), lambda i: (0, 0)),
                pl.BlockSpec((G, 9 * C + 1), lambda i: (0, 0)),
            ],
            out_specs=pl.BlockSpec((N, C + G, HW), lambda i: (0, 0, 0)),
        ),
        compiler_params=pltpu.CompilerParams(dimension_semantics=("arbitrary",)),
    )(x_flat, gb, wb)

    # TODO(synk): training-mode running_mean/running_var buffer updates (a module side
    # effect, not part of the returned tensor) are not emitted.
    return out_flat.reshape(N, C + G, H, W)


def _reference(x_nchw, gamma, beta, conv_w_hwio, conv_b, eps=1e-5):
    x = jnp.transpose(x_nchw, (0, 2, 3, 1))                       # NHWC
    mean = jnp.mean(x, axis=(0, 1, 2))
    var = jnp.mean((x - mean) ** 2, axis=(0, 1, 2))
    y = (x - mean) / jnp.sqrt(var + eps) * gamma + beta
    y = jnp.maximum(y, 0.0)
    conv = jax.lax.conv_general_dilated(
        y, conv_w_hwio, window_strides=(1, 1), padding=((1, 1), (1, 1)),
        dimension_numbers=("NHWC", "HWIO", "NHWC")) + conv_b
    out = jnp.concatenate([x, conv], axis=-1)
    return jnp.transpose(out, (0, 3, 1, 2))                       # back to NCHW


if __name__ == "__main__":
    # Small shapes consistent with the module: batch=2, in_channels=4, H=W=16, growth_rate=8
    N, C, H, W, G = 2, 4, 16, 16, 8
    key = jax.random.PRNGKey(0)
    kx, kw, kb = jax.random.split(key, 3)

    x = jax.random.normal(kx, (N, C, H, W), dtype=jnp.float32)    # NCHW (PyTorch layout)

    # Deterministic parameter init (shapes from __init__):
    gamma = jnp.ones((C,), jnp.float32)                           # BatchNorm2d weight init
    beta = jnp.zeros((C,), jnp.float32)                           # BatchNorm2d bias init
    fan_in = C * 3 * 3
    bound = 1.0 / np.sqrt(fan_in)
    conv_w = jax.random.uniform(kw, (3, 3, C, G), jnp.float32, -bound, bound)   # HWIO
    conv_b = jax.random.uniform(kb, (G,), jnp.float32, -bound, bound)

    out = single_layer_forward(x, gamma, beta, conv_w, conv_b)
    out = jax.block_until_ready(out)

    ref = _reference(x, gamma, beta, conv_w, conv_b)
    assert out.shape == (N, C + G, H, W), out.shape
    np.testing.assert_allclose(np.asarray(out), np.asarray(ref), rtol=1e-4, atol=1e-4)

    print("KERNEL_OK")
</pallas_src>

<mosaic_0001>
module attributes {stable_mosaic.version = 11 : i64} {
  func.func @kernel(%arg0: i32, %arg1: memref<2x4x256xf32, #tpu.memory_space<vmem>>, %arg2: memref<4x2xf32, #tpu.memory_space<vmem>>, %arg3: memref<8x37xf32, #tpu.memory_space<vmem>>, %arg4: memref<2x12x256xf32, #tpu.memory_space<vmem>>) attributes {dimension_semantics = [#tpu.dimension_semantics<arbitrary>], iteration_bounds = array<i64: 1>, scalar_prefetch = 0 : i64, scratch_operands = 0 : i64, tpu.core_type = #tpu.core_type<tc>, window_params = [{pipeline_mode = #tpu.pipeline_mode<synchronous>, transform_indices = @transform_0, window_bounds = array<i64: 2, 4, 256>}, {pipeline_mode = #tpu.pipeline_mode<synchronous>, transform_indices = @transform_1, window_bounds = array<i64: 4, 2>}, {pipeline_mode = #tpu.pipeline_mode<synchronous>, transform_indices = @transform_2, window_bounds = array<i64: 8, 37>}, {pipeline_mode = #tpu.pipeline_mode<synchronous>, transform_indices = @transform_3, window_bounds = array<i64: 2, 12, 256>}]} {
    %c0 = arith.constant 0 : index
    %c0_0 = arith.constant 0 : index
    %c0_1 = arith.constant 0 : index
    %0 = vector.load %arg1[%c0, %c0_0, %c0_1] : memref<2x4x256xf32, #tpu.memory_space<vmem>>, vector<1x4x256xf32>
    %1 = vector.shape_cast %0 : vector<1x4x256xf32> to vector<4x256xf32>
    %c1 = arith.constant 1 : index
    %c0_2 = arith.constant 0 : index
    %c0_3 = arith.constant 0 : index
    %2 = vector.load %arg1[%c1, %c0_2, %c0_3] : memref<2x4x256xf32, #tpu.memory_space<vmem>>, vector<1x4x256xf32>
    %3 = vector.shape_cast %2 : vector<1x4x256xf32> to vector<4x256xf32>
    %4 = arith.addf %1, %3 : vector<4x256xf32>
    %cst = arith.constant dense<0.000000e+00> : vector<4xf32>
    %5 = vector.multi_reduction <add>, %4, %cst [1] : vector<4x256xf32> to vector<4xf32>
    %6 = vector.shape_cast %5 : vector<4xf32> to vector<4x1xf32>
    %cst_4 = arith.constant 0.001953125 : f32
    %7 = vector.broadcast %cst_4 : f32 to vector<4x1xf32>
    %8 = arith.mulf %6, %7 : vector<4x1xf32>
    %cst_5 = arith.constant 0.000000e+00 : f32
    %9 = vector.broadcast %cst_5 : f32 to vector<4x256xf32>
    %10 = vector.broadcast %8 : vector<4x1xf32> to vector<4x256xf32>
    %11 = arith.subf %1, %10 : vector<4x256xf32>
    %12 = arith.mulf %11, %11 : vector<4x256xf32>
    %13 = arith.addf %9, %12 : vector<4x256xf32>
    %14 = vector.broadcast %8 : vector<4x1xf32> to vector<4x256xf32>
    %15 = arith.subf %3, %14 : vector<4x256xf32>
    %16 = arith.mulf %15, %15 : vector<4x256xf32>
    %17 = arith.addf %13, %16 : vector<4x256xf32>
    %cst_6 = arith.constant dense<0.000000e+00> : vector<4xf32>
    %18 = vector.multi_reduction <add>, %17, %cst_6 [1] : vector<4x256xf32> to vector<4xf32>
    %19 = vector.shape_cast %18 : vector<4xf32> to vector<4x1xf32>
    %cst_7 = arith.constant 0.001953125 : f32
    %20 = vector.broadcast %cst_7 : f32 to vector<4x1xf32>
    %21 = arith.mulf %19, %20 : vector<4x1xf32>
    %c0_8 = arith.constant 0 : index
    %c0_9 = arith.constant 0 : index
    %22 = vector.load %arg2[%c0_8, %c0_9] : memref<4x2xf32, #tpu.memory_space<vmem>>, vector<4x2xf32>
    %23 = vector.extract_strided_slice %22 {offsets = [0, 0], sizes = [4, 1], strides = [1, 1]} : vector<4x2xf32> to vector<4x1xf32>
    %24 = vector.extract_strided_slice %22 {offsets = [0, 1], sizes = [4, 1], strides = [1, 1]} : vector<4x2xf32> to vector<4x1xf32>
    %cst_10 = arith.constant 9.99999974E-6 : f32
    %25 = vector.broadcast %cst_10 : f32 to vector<4x1xf32>
    %26 = arith.addf %21, %25 : vector<4x1xf32>
    %27 = math.rsqrt %26 : vector<4x1xf32>
    %28 = arith.mulf %23, %27 : vector<4x1xf32>
    %29 = arith.mulf %8, %28 : vector<4x1xf32>
    %30 = arith.subf %24, %29 : vector<4x1xf32>
    %c0_11 = arith.constant 0 : index
    %c0_12 = arith.constant 0 : index
    %31 = vector.load %arg3[%c0_11, %c0_12] : memref<8x37xf32, #tpu.memory_space<vmem>>, vector<8x37xf32>
    %32 = vector.extract_strided_slice %31 {offsets = [0, 0], sizes = [8, 36], strides = [1, 1]} : vector<8x37xf32> to vector<8x36xf32>
    %33 = vector.extract_strided_slice %31 {offsets = [0, 36], sizes = [8, 1], strides = [1, 1]} : vector<8x37xf32> to vector<8x1xf32>
    %34 = tpu.iota {dimensions = array<i32: 1>} : vector<1x256xi32>
    %c15_i32 = arith.constant 15 : i32
    %35 = vector.broadcast %c15_i32 : i32 to vector<1x256xi32>
    %36 = arith.andi %34, %35 : vector<1x256xi32>
    %c1_i32 = arith.constant 1 : i32
    %37 = vector.broadcast %c1_i32 : i32 to vector<1x256xi32>
    %38 = arith.cmpi sge, %36, %37 : vector<1x256xi32>
    %c14_i32 = arith.constant 14 : i32
    %39 = vector.broadcast %c14_i32 : i32 to vector<1x256xi32>
    %40 = arith.cmpi sle, %36, %39 : vector<1x256xi32>
    %cst_13 = arith.constant 0.000000e+00 : f32
    %41 = vector.broadcast %cst_13 : f32 to vector<4x17xf32>
    %42 = vector.broadcast %28 : vector<4x1xf32> to vector<4x256xf32>
    %43 = arith.mulf %1, %42 : vector<4x256xf32>
    %44 = vector.broadcast %30 : vector<4x1xf32> to vector<4x256xf32>
    %45 = arith.addf %43, %44 : vector<4x256xf32>
    %cst_14 = arith.constant 0.000000e+00 : f32
    %46 = vector.broadcast %cst_14 : f32 to vector<4x256xf32>
    %47 = arith.maximumf %45, %46 : vector<4x256xf32>
    %48 = tpu.concatenate %41, %47, %41 in 1 : vector<4x17xf32>, vector<4x256xf32>, vector<4x17xf32> -> vector<4x290xf32>
    %49 = vector.extract_strided_slice %48 {offsets = [0, 0], sizes = [4, 256], strides = [1, 1]} : vector<4x290xf32> to vector<4x256xf32>
    %cst_15 = arith.constant 0.000000e+00 : f32
    %50 = vector.shape_cast %38 : vector<1x256xi1> to vector<1x256xi1>
    %51 = vector.broadcast %50 : vector<1x256xi1> to vector<4x256xi1>
    %52 = vector.broadcast %cst_15 : f32 to vector<4x256xf32>
    %53 = arith.select %51, %49, %52 : vector<4x256xi1>, vector<4x256xf32>
    %54 = vector.extract_strided_slice %48 {offsets = [0, 1], sizes = [4, 256], strides = [1, 1]} : vector<4x290xf32> to vector<4x256xf32>
    %55 = vector.extract_strided_slice %48 {offsets = [0, 2], sizes = [4, 256], strides = [1, 1]} : vector<4x290xf32> to vector<4x256xf32>
    %cst_16 = arith.constant 0.000000e+00 : f32
    %56 = vector.shape_cast %40 : vector<1x256xi1> to vector<1x256xi1>
    %57 = vector.broadcast %56 : vector<1x256xi1> to vector<4x256xi1>
    %58 = vector.broadcast %cst_16 : f32 to vector<4x256xf32>
    %59 = arith.select %57, %55, %58 : vector<4x256xi1>, vector<4x256xf32>
    %60 = vector.extract_strided_slice %48 {offsets = [0, 16], sizes = [4, 256], strides = [1, 1]} : vector<4x290xf32> to vector<4x256xf32>
    %cst_17 = arith.constant 0.000000e+00 : f32
    %61 = vector.shape_cast %38 : vector<1x256xi1> to vector<1x256xi1>
    %62 = vector.broadcast %61 : vector<1x256xi1> to vector<4x256xi1>
    %63 = vector.broadcast %cst_17 : f32 to vector<4x256xf32>
    %64 = arith.select %62, %60, %63 : vector<4x256xi1>, vector<4x256xf32>
    %65 = vector.extract_strided_slice %48 {offsets = [0, 17], sizes = [4, 256], strides = [1, 1]} : vector<4x290xf32> to vector<4x256xf32>
    %66 = vector.extract_strided_slice %48 {offsets = [0, 18], sizes = [4, 256], strides = [1, 1]} : vector<4x290xf32> to vector<4x256xf32>
    %cst_18 = arith.constant 0.000000e+00 : f32
    %67 = vector.shape_cast %40 : vector<1x256xi1> to vector<1x256xi1>
    %68 = vector.broadcast %67 : vector<1x256xi1> to vector<4x256xi1>
    %69 = vector.broadcast %cst_18 : f32 to vector<4x256xf32>
    %70 = arith.select %68, %66, %69 : vector<4x256xi1>, vector<4x256xf32>
    %71 = vector.extract_strided_slice %48 {offsets = [0, 32], sizes = [4, 256], strides = [1, 1]} : vector<4x290xf32> to vector<4x256xf32>
    %cst_19 = arith.constant 0.000000e+00 : f32
    %72 = vector.shape_cast %38 : vector<1x256xi1> to vector<1x256xi1>
    %73 = vector.broadcast %72 : vector<1x256xi1> to vector<4x256xi1>
    %74 = vector.broadcast %cst_19 : f32 to vector<4x256xf32>
    %75 = arith.select %73, %71, %74 : vector<4x256xi1>, vector<4x256xf32>
    %76 = vector.extract_strided_slice %48 {offsets = [0, 33], sizes = [4, 256], strides = [1, 1]} : vector<4x290xf32> to vector<4x256xf32>
    %77 = vector.extract_strided_slice %48 {offsets = [0, 34], sizes = [4, 256], strides = [1, 1]} : vector<4x290xf32> to vector<4x256xf32>
    %cst_20 = arith.constant 0.000000e+00 : f32
    %78 = vector.shape_cast %40 : vector<1x256xi1> to vector<1x256xi1>
    %79 = vector.broadcast %78 : vector<1x256xi1> to vector<4x256xi1>
    %80 = vector.broadcast %cst_20 : f32 to vector<4x256xf32>
    %81 = arith.select %79, %77, %80 : vector<4x256xi1>, vector<4x256xf32>
    %82 = tpu.concatenate %53, %54, %59, %64, %65, %70, %75, %76, %81 in 0 : vector<4x256xf32>, vector<4x256xf32>, vector<4x256xf32>, vector<4x256xf32>, vector<4x256xf32>, vector<4x256xf32>, vector<4x256xf32>, vector<4x256xf32>, vector<4x256xf32> -> vector<36x256xf32>
    %cst_21 = arith.constant dense<0.000000e+00> : vector<8x256xf32>
    %83 = tpu.matmul %32, %82, %cst_21 {dimension_numbers = #tpu.dot_dimension_numbers<[1], [0], [0], [1], [0, 0, 1, 1], [], []>} : vector<8x36xf32>, vector<36x256xf32>, vector<8x256xf32> -> vector<8x256xf32>
    %84 = vector.broadcast %33 : vector<8x1xf32> to vector<8x256xf32>
    %85 = arith.addf %83, %84 : vector<8x256xf32>
    %c0_22 = arith.constant 0 : index
    %c0_23 = arith.constant 0 : index
    %c0_24 = arith.constant 0 : index
    %86 = vector.load %arg4[%c0_22, %c0_23, %c0_24] : memref<2x12x256xf32, #tpu.memory_space<vmem>>, vector<1x4x256xf32>
    %87 = vector.shape_cast %86 : vector<1x4x256xf32> to vector<4x256xf32>
    %88 = vector.shape_cast %1 : vector<4x256xf32> to vector<1x4x256xf32>
    tpu.vector_store %arg4[%c0_22, %c0_23, %c0_24], %88 {strides = array<i32>} : memref<2x12x256xf32, #tpu.memory_space<vmem>>, vector<1x4x256xf32>,
    %c0_25 = arith.constant 0 : index
    %c4 = arith.constant 4 : index
    %c0_26 = arith.constant 0 : index
    %89 = vector.load %arg4[%c0_25, %c4, %c0_26] : memref<2x12x256xf32, #tpu.memory_space<vmem>>, vector<1x8x256xf32>
    %90 = vector.shape_cast %89 : vector<1x8x256xf32> to vector<8x256xf32>
    %91 = vector.shape_cast %85 : vector<8x256xf32> to vector<1x8x256xf32>
    tpu.vector_store %arg4[%c0_25, %c4, %c0_26], %91 {strides = array<i32>} : memref<2x12x256xf32, #tpu.memory_space<vmem>>, vector<1x8x256xf32>,
    %92 = vector.broadcast %28 : vector<4x1xf32> to vector<4x256xf32>
    %93 = arith.mulf %3, %92 : vector<4x256xf32>
    %94 = vector.broadcast %30 : vector<4x1xf32> to vector<4x256xf32>
    %95 = arith.addf %93, %94 : vector<4x256xf32>
    %cst_27 = arith.constant 0.000000e+00 : f32
    %96 = vector.broadcast %cst_27 : f32 to vector<4x256xf32>
    %97 = arith.maximumf %95, %96 : vector<4x256xf32>
    %98 = tpu.concatenate %41, %97, %41 in 1 : vector<4x17xf32>, vector<4x256xf32>, vector<4x17xf32> -> vector<4x290xf32>
    %99 = vector.extract_strided_slice %98 {offsets = [0, 0], sizes = [4, 256], strides = [1, 1]} : vector<4x290xf32> to vector<4x256xf32>
    %cst_28 = arith.constant 0.000000e+00 : f32
    %100 = vector.shape_cast %38 : vector<1x256xi1> to vector<1x256xi1>
    %101 = vector.broadcast %100 : vector<1x256xi1> to vector<4x256xi1>
    %102 = vector.broadcast %cst_28 : f32 to vector<4x256xf32>
    %103 = arith.select %101, %99, %102 : vector<4x256xi1>, vector<4x256xf32>
    %104 = vector.extract_strided_slice %98 {offsets = [0, 1], sizes = [4, 256], strides = [1, 1]} : vector<4x290xf32> to vector<4x256xf32>
    %105 = vector.extract_strided_slice %98 {offsets = [0, 2], sizes = [4, 256], strides = [1, 1]} : vector<4x290xf32> to vector<4x256xf32>
    %cst_29 = arith.constant 0.000000e+00 : f32
    %106 = vector.shape_cast %40 : vector<1x256xi1> to vector<1x256xi1>
    %107 = vector.broadcast %106 : vector<1x256xi1> to vector<4x256xi1>
    %108 = vector.broadcast %cst_29 : f32 to vector<4x256xf32>
    %109 = arith.select %107, %105, %108 : vector<4x256xi1>, vector<4x256xf32>
    %110 = vector.extract_strided_slice %98 {offsets = [0, 16], sizes = [4, 256], strides = [1, 1]} : vector<4x290xf32> to vector<4x256xf32>
    %cst_30 = arith.constant 0.000000e+00 : f32
    %111 = vector.shape_cast %38 : vector<1x256xi1> to vector<1x256xi1>
    %112 = vector.broadcast %111 : vector<1x256xi1> to vector<4x256xi1>
    %113 = vector.broadcast %cst_30 : f32 to vector<4x256xf32>
    %114 = arith.select %112, %110, %113 : vector<4x256xi1>, vector<4x256xf32>
    %115 = vector.extract_strided_slice %98 {offsets = [0, 17], sizes = [4, 256], strides = [1, 1]} : vector<4x290xf32> to vector<4x256xf32>
    %116 = vector.extract_strided_slice %98 {offsets = [0, 18], sizes = [4, 256], strides = [1, 1]} : vector<4x290xf32> to vector<4x256xf32>
    %cst_31 = arith.constant 0.000000e+00 : f32
    %117 = vector.shape_cast %40 : vector<1x256xi1> to vector<1x256xi1>
    %118 = vector.broadcast %117 : vector<1x256xi1> to vector<4x256xi1>
    %119 = vector.broadcast %cst_31 : f32 to vector<4x256xf32>
    %120 = arith.select %118, %116, %119 : vector<4x256xi1>, vector<4x256xf32>
    %121 = vector.extract_strided_slice %98 {offsets = [0, 32], sizes = [4, 256], strides = [1, 1]} : vector<4x290xf32> to vector<4x256xf32>
    %cst_32 = arith.constant 0.000000e+00 : f32
    %122 = vector.shape_cast %38 : vector<1x256xi1> to vector<1x256xi1>
    %123 = vector.broadcast %122 : vector<1x256xi1> to vector<4x256xi1>
    %124 = vector.broadcast %cst_32 : f32 to vector<4x256xf32>
    %125 = arith.select %123, %121, %124 : vector<4x256xi1>, vector<4x256xf32>
    %126 = vector.extract_strided_slice %98 {offsets = [0, 33], sizes = [4, 256], strides = [1, 1]} : vector<4x290xf32> to vector<4x256xf32>
    %127 = vector.extract_strided_slice %98 {offsets = [0, 34], sizes = [4, 256], strides = [1, 1]} : vector<4x290xf32> to vector<4x256xf32>
    %cst_33 = arith.constant 0.000000e+00 : f32
    %128 = vector.shape_cast %40 : vector<1x256xi1> to vector<1x256xi1>
    %129 = vector.broadcast %128 : vector<1x256xi1> to vector<4x256xi1>
    %130 = vector.broadcast %cst_33 : f32 to vector<4x256xf32>
    %131 = arith.select %129, %127, %130 : vector<4x256xi1>, vector<4x256xf32>
    %132 = tpu.concatenate %103, %104, %109, %114, %115, %120, %125, %126, %131 in 0 : vector<4x256xf32>, vector<4x256xf32>, vector<4x256xf32>, vector<4x256xf32>, vector<4x256xf32>, vector<4x256xf32>, vector<4x256xf32>, vector<4x256xf32>, vector<4x256xf32> -> vector<36x256xf32>
    %cst_34 = arith.constant dense<0.000000e+00> : vector<8x256xf32>
    %133 = tpu.matmul %32, %132, %cst_34 {dimension_numbers = #tpu.dot_dimension_numbers<[1], [0], [0], [1], [0, 0, 1, 1], [], []>} : vector<8x36xf32>, vector<36x256xf32>, vector<8x256xf32> -> vector<8x256xf32>
    %134 = vector.broadcast %33 : vector<8x1xf32> to vector<8x256xf32>
    %135 = arith.addf %133, %134 : vector<8x256xf32>
    %c1_35 = arith.constant 1 : index
    %c0_36 = arith.constant 0 : index
    %c0_37 = arith.constant 0 : index
    %136 = vector.load %arg4[%c1_35, %c0_36, %c0_37] : memref<2x12x256xf32, #tpu.memory_space<vmem>>, vector<1x4x256xf32>
    %137 = vector.shape_cast %136 : vector<1x4x256xf32> to vector<4x256xf32>
    %138 = vector.shape_cast %3 : vector<4x256xf32> to vector<1x4x256xf32>
    tpu.vector_store %arg4[%c1_35, %c0_36, %c0_37], %138 {strides = array<i32>} : memref<2x12x256xf32, #tpu.memory_space<vmem>>, vector<1x4x256xf32>,
    %c1_38 = arith.constant 1 : index
    %c4_39 = arith.constant 4 : index
    %c0_40 = arith.constant 0 : index
    %139 = vector.load %arg4[%c1_38, %c4_39, %c0_40] : memref<2x12x256xf32, #tpu.memory_space<vmem>>, vector<1x8x256xf32>
    %140 = vector.shape_cast %139 : vector<1x8x256xf32> to vector<8x256xf32>
    %141 = vector.shape_cast %135 : vector<8x256xf32> to vector<1x8x256xf32>
    tpu.vector_store %arg4[%c1_38, %c4_39, %c0_40], %141 {strides = array<i32>} : memref<2x12x256xf32, #tpu.memory_space<vmem>>, vector<1x8x256xf32>,
    return
  }
  func.func @transform_0(%arg0: i32) -> (i32, i32, i32) {
    %c0_i32 = arith.constant 0 : i32
    %c0_i32_0 = arith.constant 0 : i32
    %c0_i32_1 = arith.constant 0 : i32
    %c0_i32_2 = arith.constant 0 : i32
    return %c0_i32, %c0_i32_0, %c0_i32_1 : i32, i32, i32
  }
  func.func @transform_1(%arg0: i32) -> (i32, i32) {
    %c0_i32 = arith.constant 0 : i32
    %c0_i32_0 = arith.constant 0 : i32
    %c0_i32_1 = arith.constant 0 : i32
    return %c0_i32, %c0_i32_0 : i32, i32
  }
  func.func @transform_2(%arg0: i32) -> (i32, i32) {
    %c0_i32 = arith.constant 0 : i32
    %c0_i32_0 = arith.constant 0 : i32
    %c0_i32_1 = arith.constant 0 : i32
    return %c0_i32, %c0_i32_0 : i32, i32
  }
  func.func @transform_3(%arg0: i32) -> (i32, i32, i32) {
    %c0_i32 = arith.constant 0 : i32
    %c0_i32_0 = arith.constant 0 : i32
    %c0_i32_1 = arith.constant 0 : i32
    %c0_i32_2 = arith.constant 0 : i32
    return %c0_i32, %c0_i32_0, %c0_i32_1 : i32, i32, i32
  }
}

</mosaic_0001>

<llo_original>
// kernel: tpu_custom_call.1
$region0: #{tpu_custom_call.1}
  #allocation0 [shape = 'u32[]', space=smem, size = 0x4, offset = 0x4, fixed_abs, tag = 'smem constant byte address 0x4 - core index']
  #allocation1 [shape = 'u32[144,128]{1,0:T(1,128)}', space=vmem, size = 0x12000, scoped, tag = 'internal scratch']
  %s0 = inlined_call_operand.hbm [shape: f32[2,4,256], index: 0, kind: input, shape index: {}]
  %s1 = inlined_call_operand.vmem [shape: f32[4,2], index: 1, kind: input, shape index: {}]
  %s2 = inlined_call_operand.vmem [shape: f32[8,37], index: 2, kind: input, shape index: {}]
  %s3 = inlined_call_operand.vmem [shape: f32[2,12,256], index: 3, kind: output, shape index: {}]
  %s4 = sld [smem:[#allocation0]]
  $region26: #{tpu_custom_call.1} parent=0
    _
  %s6 = ssub.s32 1, %s4
  %s7 = scalar_select 0, %s6, %s4
  $region1: #{tpu_custom_call.1} parent=0
    #allocation2 [shape = 'u8[8192]{0}', space=vmem, size = 0x2000, scoped, tag = 'input window, operand 0, single buffered']
    #allocation3 [shape = 's32[1]{0}', space=sflag, size = 0x4, scoped, tag = 'scoped memory for tpu_custom_call.1']
    %8 = vsyncpa [#allocation3], 0
    // Predicated region
    $region2: #{tpu_custom_call.1} parent=1 // pred_check
      _
    $region3: #{tpu_custom_call.1} parent=1 // pred_check_branch
      %10 = sbr.rel (0) target = $region5
    $region4: #{tpu_custom_call.1} parent=1 // pred_region
      %s12 = ssub.s32 256, 256
      %13 = vsyncadd [#allocation3], %s12
      %s14 = sshll.u32 [#allocation2], 4
      %s15 = int_to_ptr.vmem [resolvable:$true] %s14
      %20 = dma.hbm_to_vmem [thread:$0]  %s0, 256, %s15, [#allocation3], 128, 128, 8
    $region5: #{tpu_custom_call.1} parent=1 // pred_fallthru
      _
    // Predicated region
    $region6: #{tpu_custom_call.1} parent=1 // pred_check
      _
    $region7: #{tpu_custom_call.1} parent=1 // pred_check_branch
      %22 = sbr.rel (0) target = $region9
    $region8: #{tpu_custom_call.1} parent=1 // pred_region
      _
    $region9: #{tpu_custom_call.1} parent=1 // pred_fallthru
      _
    // Predicated region
    $region10: #{tpu_custom_call.1} parent=1 // pred_check
      _
    $region11: #{tpu_custom_call.1} parent=1 // pred_check_branch
      %24 = sbr.rel (0) target = $region13
    $region12: #{tpu_custom_call.1} parent=1 // pred_region
      _
    $region13: #{tpu_custom_call.1} parent=1 // pred_fallthru
      _
    // Predicated region
    $region14: #{tpu_custom_call.1} parent=1 // pred_check
      _
    $region15: #{tpu_custom_call.1} parent=1 // pred_check_branch
      %26 = sbr.rel (0) target = $region17
    $region16: #{tpu_custom_call.1} parent=1 // pred_region
      %27 = dma.done [#allocation3], 256
    $region17: #{tpu_custom_call.1} parent=1 // pred_fallthru
      _
    %v28 = vld [vmem:[#allocation2] sm:$0xff]
    %s29 = scalar_lea.vmem [#allocation2], 8
    %v30 = vld [vmem:[%s29] sm:$0xff]
    %v31 = vadd.f32 %v28, %v30
    %v33 = vcombine.high %v31, %v31
    %vm35 = vcmask 1043456
    %v36 = vsel %vm35, %v31, 0.0
    %v37 = vsel %vm35, %v33, 0.0
    %v38 = vadd.f32 %v36, %v37
    %39 = vadd.xlane.f32.xlu0 %v38
    %v40 = vpop.xlane.xlu0 %39
    %v41 = vmul.f32 %v40, 0.001953125
    %v44 = vunpack.c.l.s4 839922192
    %v45 = vunpack.c.0.s8 %v44
    %v46 = vlaneseq
    %v47 = vshrl.u32 %v46, 7
    %v48 = vsub.s32 %v45, %v47
    %v49 = vrot.slane %v41, %v48
    %v51 = vsub.f32 %v28, %v49
    %v52 = vmul.f32 %v51, %v51
    %v53 = vadd.f32 %v52, 0.0
    %v54 = vsub.f32 %v30, %v49
    %v55 = vmul.f32 %v54, %v54
    %v56 = vadd.f32 %v53, %v55
    %v58 = vcombine.high %v56, %v56
    %v60 = vsel %vm35, %v56, 0.0
    %v61 = vsel %vm35, %v58, 0.0
    %v62 = vadd.f32 %v60, %v61
    %63 = vadd.xlane.f32.xlu0 %v62
    %v64 = vpop.xlane.xlu0 %63
    %v65 = vmul.f32 %v64, 0.001953125
    %v66 = vld [vmem:[%s1] sm:$0xf]
    %v67 = vadd.f32 %v65, 1e-05
    %v68 = vrsqrt.pop %v67
    %v69 = vmul.f32 %v66, %v68
    %v70 = vmul.f32 %v41, %v69
    %72 = vrot.lane.b32.xlu0 %v70, 1
    %v73 = vpop.permute.xlu0 %72
    %v75 = vsub.f32 %v66, %v73
    %v76 = vld [vmem:[%s2] sm:$0xff]
    %v77 = vlaneseq
    %v78 = vand.u32 %v77, 127
    %v79 = vadd.s32 %v78, 128
    %v80 = vand.u32 %v78, 15
    %v81 = vand.u32 %v79, 15
    %vm82 = vcmp.ge.s32.totalorder %v80, 1
    %vm83 = vcmp.ge.s32.totalorder %v81, 1
    %vm84 = vcmp.le.s32.totalorder %v80, 14
    %vm85 = vcmp.le.s32.totalorder %v81, 14
    %87 = vset.pattern.permute.xlu0 0
    %88 = vperm.xlu0 %87, %v69
    %v89 = vpop.permute.xlu0 %88
    %v91 = vunpack.c.l.s4 839922192
    %v92 = vunpack.c.0.s8 %v91
    %v93 = vlaneseq
    %v94 = vshrl.u32 %v93, 7
    %v95 = vsub.s32 %v92, %v94
    %v96 = vrot.slane %v89, %v95
    %v98 = vmul.f32 %v28, %v96
    %100 = vset.pattern.permute.xlu0 1
    %101 = vperm.xlu0 %100, %v75
    %v102 = vpop.permute.xlu0 %101
    %v104 = vunpack.c.l.s4 839922192
    %v105 = vunpack.c.0.s8 %v104
    %v106 = vlaneseq
    %v107 = vshrl.u32 %v106, 7
    %v108 = vsub.s32 %v105, %v107
    %v109 = vrot.slane %v102, %v108
    %v111 = vadd.f32 %v98, %v109
    %v112 = vmax.f32 %v111, 0.0
    %v114 = vcombine.high %v112, %v112
    %115 = vrot.lane.b32.xlu0 %v112, 17
    %v116 = vpop.permute.xlu0 %115
    %117 = vrot.lane.b32.xlu0 %v114, 17
    %v118 = vpop.permute.xlu0 %117
    %vm119 = vcmask 138240
    %v120 = vsel %vm119, %v116, %v118
    %v124 = vsel %vm119, 0.0, %v116
    %v125 = vsel %vm119, %v118, 0.0
    %v126 = vsel %vm82, 1, 0
    %v127 = vsel %vm83, 1, 0
    %vm128 = vcmp.eq.s32.totalorder %v126, 1
    %vm129 = vcmp.eq.s32.totalorder %v127, 1
    %v130 = vsel %vm128, %v124, 0.0
    %v131 = vsel %vm129, %v120, 0.0
    %v132 = vsel %vm84, 1, 0
    %v133 = vsel %vm85, 1, 0
    %vm134 = vcmp.eq.s32.totalorder %v132, 1
    %vm135 = vcmp.eq.s32.totalorder %v133, 1
    %138 = vrot.lane.b32.xlu0 %v124, 126
    %v139 = vpop.permute.xlu0 %138
    %140 = vrot.lane.b32.xlu0 %v120, 126
    %v141 = vpop.permute.xlu0 %140
    %142 = vrot.lane.b32.xlu0 %v125, 126
    %v143 = vpop.permute.xlu0 %142
    %vm144 = vcmask 1031168
    %v145 = vsel %vm144, %v139, %v141
    %v146 = vsel %vm144, %v141, %v143
    %v149 = vsel %vm134, %v145, 0.0
    %v150 = vsel %vm135, %v146, 0.0
    %151 = vrot.lane.b32.xlu0 %v124, 112
    %v152 = vpop.permute.xlu0 %151
    %153 = vrot.lane.b32.xlu0 %v120, 112
    %v154 = vpop.permute.xlu0 %153
    %155 = vrot.lane.b32.xlu0 %v125, 112
    %v156 = vpop.permute.xlu0 %155
    %vm157 = vcmask 916480
    %v158 = vsel %vm157, %v152, %v154
    %v159 = vsel %vm157, %v154, %v156
    %v162 = vsel %vm128, %v158, 0.0
    %v163 = vsel %vm129, %v159, 0.0
    %164 = vrot.lane.b32.xlu0 %v124, 110
    %v165 = vpop.permute.xlu0 %164
    %166 = vrot.lane.b32.xlu0 %v120, 110
    %v167 = vpop.permute.xlu0 %166
    %168 = vrot.lane.b32.xlu0 %v125, 110
    %v169 = vpop.permute.xlu0 %168
    %vm170 = vcmask 900096
    %v171 = vsel %vm170, %v165, %v167
    %v172 = vsel %vm170, %v167, %v169
    %v175 = vsel %vm134, %v171, 0.0
    %v176 = vsel %vm135, %v172, 0.0
    %177 = vrot.lane.b32.xlu0 %v124, 96
    %v178 = vpop.permute.xlu0 %177
    %179 = vrot.lane.b32.xlu0 %v120, 96
    %v180 = vpop.permute.xlu0 %179
    %181 = vrot.lane.b32.xlu0 %v125, 96
    %v182 = vpop.permute.xlu0 %181
    %vm183 = vcmask 785408
    %v184 = vsel %vm183, %v178, %v180
    %v185 = vsel %vm183, %v180, %v182
    %v188 = vsel %vm128, %v184, 0.0
    %v189 = vsel %vm129, %v185, 0.0
    %190 = vrot.lane.b32.xlu0 %v124, 94
    %v191 = vpop.permute.xlu0 %190
    %192 = vrot.lane.b32.xlu0 %v120, 94
    %v193 = vpop.permute.xlu0 %192
    %194 = vrot.lane.b32.xlu0 %v125, 94
    %v195 = vpop.permute.xlu0 %194
    %vm196 = vcmask 769024
    %v197 = vsel %vm196, %v191, %v193
    %v198 = vsel %vm196, %v193, %v195
    %v201 = vsel %vm134, %v197, 0.0
    %v202 = vsel %vm135, %v198, 0.0
    %v203 = vrot.slane %v124, 4
    %v204 = vrot.slane %v120, 4
    %v205 = vrot.slane %v125, 4
    %206 = vrot.lane.b32.xlu0 %v203, 127
    %v207 = vpop.permute.xlu0 %206
    %208 = vrot.lane.b32.xlu0 %v204, 127
    %v209 = vpop.permute.xlu0 %208
    %210 = vrot.lane.b32.xlu0 %v205, 127
    %v211 = vpop.permute.xlu0 %210
    %vm212 = vcmask 1039360
    %v213 = vsel %vm212, %v207, %v209
    %v214 = vsel %vm212, %v209, %v211
    %v219 = vrot.slane %v162, 4
    %v220 = vrot.slane %v163, 4
    %223 = vrot.lane.b32.xlu0 %v124, 111
    %v224 = vpop.permute.xlu0 %223
    %225 = vrot.lane.b32.xlu0 %v120, 111
    %v226 = vpop.permute.xlu0 %225
    %227 = vrot.lane.b32.xlu0 %v125, 111
    %v228 = vpop.permute.xlu0 %227
    %vm229 = vcmask 908288
    %v230 = vsel %vm229, %v224, %v226
    %v231 = vsel %vm229, %v226, %v228
    %v236 = vrot.slane %v175, 4
    %v237 = vrot.slane %v176, 4
    %240 = vrot.lane.b32.xlu0 %v203, 95
    %v241 = vpop.permute.xlu0 %240
    %242 = vrot.lane.b32.xlu0 %v204, 95
    %v243 = vpop.permute.xlu0 %242
    %244 = vrot.lane.b32.xlu0 %v205, 95
    %v245 = vpop.permute.xlu0 %244
    %vm246 = vcmask 777216
    %v247 = vsel %vm246, %v241, %v243
    %v248 = vsel %vm246, %v243, %v245
    %v251 = vsel %vm35, %v130, %v213
    %v252 = vsel %vm35, %v131, %v214
    %v253 = vsel %vm35, %v149, %v219
    %v254 = vsel %vm35, %v150, %v220
    %v255 = vsel %vm35, %v230, %v236
    %v256 = vsel %vm35, %v231, %v237
    %v257 = vsel %vm35, %v188, %v247
    %v258 = vsel %vm35, %v189, %v248
    %260 = vset.pattern.permute.xlu0 36
    %261 = vperm.xlu0 %260, %v76
    %v262 = vpop.permute.xlu0 %261
    %vm264 = vcmask 293888
    %v265 = vsel %vm264, %v76, 0
    %v268 = vsel %vm35, %v201, 0
    %v271 = vsel %vm35, %v202, 0
    %273 = vmatprep.subr.mxu0 0.0
    %274 = vmatpush1.msra.mxu0 0.0
    %275 = vmatprep.subr.mxu0 0.0
    %276 = vmatpush1.msra.mxu0 0.0
    %277 = vmatprep.subr.mxu0 0.0
    %278 = vmatpush1.msra.mxu0 0.0
    %279 = vmatprep.subr.mxu0 0.0
    %280 = vmatpush1.msra.mxu0 0.0
    %281 = vmatprep.subr.mxu0 0.0
    %282 = vmatpush1.msra.mxu0 0.0
    %283 = vmatprep.subr.mxu0 0.0
    %284 = vmatpush1.msra.mxu0 0.0
    %285 = vmatprep.subr.mxu0 0.0
    %286 = vmatpush1.msra.mxu0 0.0
    %287 = vmatprep.subr.mxu0 0.0
    %288 = vmatpush1.msra.mxu0 0.0
    %289 = vmatprep.subr.mxu0 0.0
    %290 = vmatpush1.msra.mxu0 0.0
    %291 = vmatprep.subr.mxu0 0.0
    %292 = vmatpush1.msra.mxu0 0.0
    %293 = vmatprep.subr.mxu0 0.0
    %294 = vmatpush1.msra.mxu0 0.0
    %295 = vmatprep.subr.mxu0 %v271
    %296 = vmatpush1.msra.mxu0 %v268
    %297 = vmatprep.subr.mxu0 %v258
    %298 = vmatpush1.msra.mxu0 %v257
    %299 = vmatprep.subr.mxu0 %v256
    %300 = vmatpush1.msra.mxu0 %v255
    %301 = vmatprep.subr.mxu0 %v254
    %302 = vmatpush1.msra.mxu0 %v253
    %303 = vmatprep.subr.mxu0 %v252
    %304 = vmatpush1.msra.mxu0 %v251
    %305 = vmatprep.subr.mxu0 0.0
    %306 = vmatpush2.msra.mxu0 0.0
    %307 = vmatprep.subr.mxu0 0.0
    %308 = vmatpush2.msra.mxu0 0.0
    %309 = vmatprep.subr.mxu0 0.0
    %310 = vmatpush2.msra.mxu0 0.0
    %311 = vmatprep.subr.mxu0 0.0
    %312 = vmatpush2.msra.mxu0 0.0
    %313 = vmatprep.subr.mxu0 0.0
    %314 = vmatpush2.msra.mxu0 0.0
    %315 = vmatprep.subr.mxu0 0.0
    %316 = vmatpush2.msra.mxu0 0.0
    %317 = vmatprep.subr.mxu0 0.0
    %318 = vmatpush2.msra.mxu0 0.0
    %319 = vmatprep.subr.mxu0 0.0
    %320 = vmatpush2.msra.mxu0 0.0
    %321 = vmatprep.subr.mxu0 0.0
    %322 = vmatpush2.msra.mxu0 0.0
    %323 = vmatprep.subr.mxu0 0.0
    %324 = vmatpush2.msra.mxu0 0.0
    %325 = vmatprep.subr.mxu0 0.0
    %326 = vmatpush2.msra.mxu0 0.0
    %327 = vmatprep.subr.mxu0 0.0
    %328 = vmatpush2.msra.mxu0 0.0
    %329 = vmatprep.subr.mxu0 0.0
    %330 = vmatpush2.msra.mxu0 0.0
    %331 = vmatprep.subr.mxu0 0.0
    %332 = vmatpush2.msra.mxu0 0.0
    %333 = vmatprep.subr.mxu0 0.0
    %334 = vmatpush2.msra.mxu0 0.0
    %335 = vmatprep.subr.mxu0 0.0
    %336 = vmatpush2.msra.mxu0 0.0
    %337 = vmatprep.mubr.f32.mxu0 0.0
    %338 = vmatmul.mubr.f32.gmra.mxu0 %v265
    %v339 = vpop.f32.mrf.mxu0
    %v340 = vadd.f32 %v262, %v339
    %v341 = vpop.f32.mrf.mxu0
    %v342 = vadd.f32 %v262, %v341
    %343 = vdwg.mxu0
    %v345 = vcombine.high %v28, %v28
    %347 = vst [vmem:[%s3] sm:$0xf] %v28
    %348 = vst [vmem:[%s3 + $0x8] sm:$0xf] %v345
    %v351 = vrot.slane %v340, 4
    %v352 = vrot.slane %v342, 4
    %355 = vst [vmem:[%s3] sm:$0xf0] %v351
    %356 = vst [vmem:[%s3 + $0x8] sm:$0xf0] %v352
    %357 = vst [vmem:[%s3 + $0x10] sm:$0xf] %v351
    %358 = vst [vmem:[%s3 + $0x18] sm:$0xf] %v352
    %v359 = vmul.f32 %v30, %v96
    %v360 = vadd.f32 %v359, %v109
    %v361 = vmax.f32 %v360, 0.0
    %v363 = vcombine.high %v361, %v361
    %364 = vrot.lane.b32.xlu0 %v361, 17
    %v365 = vpop.permute.xlu0 %364
    %366 = vrot.lane.b32.xlu0 %v363, 17
    %v367 = vpop.permute.xlu0 %366
    %v368 = vsel %vm119, %v365, %v367
    %v372 = vsel %vm119, 0.0, %v365
    %v373 = vsel %vm119, %v367, 0.0
    %v374 = vsel %vm128, %v372, 0.0
    %v375 = vsel %vm129, %v368, 0.0
    %378 = vrot.lane.b32.xlu0 %v372, 126
    %v379 = vpop.permute.xlu0 %378
    %380 = vrot.lane.b32.xlu0 %v368, 126
    %v381 = vpop.permute.xlu0 %380
    %382 = vrot.lane.b32.xlu0 %v373, 126
    %v383 = vpop.permute.xlu0 %382
    %v384 = vsel %vm144, %v379, %v381
    %v385 = vsel %vm144, %v381, %v383
    %v388 = vsel %vm134, %v384, 0.0
    %v389 = vsel %vm135, %v385, 0.0
    %390 = vrot.lane.b32.xlu0 %v372, 112
    %v391 = vpop.permute.xlu0 %390
    %392 = vrot.lane.b32.xlu0 %v368, 112
    %v393 = vpop.permute.xlu0 %392
    %394 = vrot.lane.b32.xlu0 %v373, 112
    %v395 = vpop.permute.xlu0 %394
    %v396 = vsel %vm157, %v391, %v393
    %v397 = vsel %vm157, %v393, %v395
    %v400 = vsel %vm128, %v396, 0.0
    %v401 = vsel %vm129, %v397, 0.0
    %402 = vrot.lane.b32.xlu0 %v372, 110
    %v403 = vpop.permute.xlu0 %402
    %404 = vrot.lane.b32.xlu0 %v368, 110
    %v405 = vpop.permute.xlu0 %404
    %406 = vrot.lane.b32.xlu0 %v373, 110
    %v407 = vpop.permute.xlu0 %406
    %v408 = vsel %vm170, %v403, %v405
    %v409 = vsel %vm170, %v405, %v407
    %v412 = vsel %vm134, %v408, 0.0
    %v413 = vsel %vm135, %v409, 0.0
    %414 = vrot.lane.b32.xlu0 %v372, 96
    %v415 = vpop.permute.xlu0 %414
    %416 = vrot.lane.b32.xlu0 %v368, 96
    %v417 = vpop.permute.xlu0 %416
    %418 = vrot.lane.b32.xlu0 %v373, 96
    %v419 = vpop.permute.xlu0 %418
    %v420 = vsel %vm183, %v415, %v417
    %v421 = vsel %vm183, %v417, %v419
    %v424 = vsel %vm128, %v420, 0.0
    %v425 = vsel %vm129, %v421, 0.0
    %426 = vrot.lane.b32.xlu0 %v372, 94
    %v427 = vpop.permute.xlu0 %426
    %428 = vrot.lane.b32.xlu0 %v368, 94
    %v429 = vpop.permute.xlu0 %428
    %430 = vrot.lane.b32.xlu0 %v373, 94
    %v431 = vpop.permute.xlu0 %430
    %v432 = vsel %vm196, %v427, %v429
    %v433 = vsel %vm196, %v429, %v431
    %v436 = vsel %vm134, %v432, 0.0
    %v437 = vsel %vm135, %v433, 0.0
    %v438 = vrot.slane %v372, 4
    %v439 = vrot.slane %v368, 4
    %v440 = vrot.slane %v373, 4
    %441 = vrot.lane.b32.xlu0 %v438, 127
    %v442 = vpop.permute.xlu0 %441
    %443 = vrot.lane.b32.xlu0 %v439, 127
    %v444 = vpop.permute.xlu0 %443
    %445 = vrot.lane.b32.xlu0 %v440, 127
    %v446 = vpop.permute.xlu0 %445
    %v447 = vsel %vm212, %v442, %v444
    %v448 = vsel %vm212, %v444, %v446
    %v453 = vrot.slane %v400, 4
    %v454 = vrot.slane %v401, 4
    %457 = vrot.lane.b32.xlu0 %v372, 111
    %v458 = vpop.permute.xlu0 %457
    %459 = vrot.lane.b32.xlu0 %v368, 111
    %v460 = vpop.permute.xlu0 %459
    %461 = vrot.lane.b32.xlu0 %v373, 111
    %v462 = vpop.permute.xlu0 %461
    %v463 = vsel %vm229, %v458, %v460
    %v464 = vsel %vm229, %v460, %v462
    %v469 = vrot.slane %v412, 4
    %v470 = vrot.slane %v413, 4
    %473 = vrot.lane.b32.xlu0 %v438, 95
    %v474 = vpop.permute.xlu0 %473
    %475 = vrot.lane.b32.xlu0 %v439, 95
    %v476 = vpop.permute.xlu0 %475
    %477 = vrot.lane.b32.xlu0 %v440, 95
    %v478 = vpop.permute.xlu0 %477
    %v479 = vsel %vm246, %v474, %v476
    %v480 = vsel %vm246, %v476, %v478
    %v483 = vsel %vm35, %v374, %v447
    %v484 = vsel %vm35, %v375, %v448
    %v485 = vsel %vm35, %v388, %v453
    %v486 = vsel %vm35, %v389, %v454
    %v487 = vsel %vm35, %v463, %v469
    %v488 = vsel %vm35, %v464, %v470
    %v489 = vsel %vm35, %v424, %v479
    %v490 = vsel %vm35, %v425, %v480
    %v492 = vsel %vm35, %v436, 0
    %v495 = vsel %vm35, %v437, 0
    %497 = vmatprep.subr.mxu0 0.0
    %498 = vmatpush1.msra.mxu0 0.0
    %499 = vmatprep.subr.mxu0 0.0
    %500 = vmatpush1.msra.mxu0 0.0
    %501 = vmatprep.subr.mxu0 0.0
    %502 = vmatpush1.msra.mxu0 0.0
    %503 = vmatprep.subr.mxu0 0.0
    %504 = vmatpush1.msra.mxu0 0.0
    %505 = vmatprep.subr.mxu0 0.0
    %506 = vmatpush1.msra.mxu0 0.0
    %507 = vmatprep.subr.mxu0 0.0
    %508 = vmatpush1.msra.mxu0 0.0
    %509 = vmatprep.subr.mxu0 0.0
    %510 = vmatpush1.msra.mxu0 0.0
    %511 = vmatprep.subr.mxu0 0.0
    %512 = vmatpush1.msra.mxu0 0.0
    %513 = vmatprep.subr.mxu0 0.0
    %514 = vmatpush1.msra.mxu0 0.0
    %515 = vmatprep.subr.mxu0 0.0
    %516 = vmatpush1.msra.mxu0 0.0
    %517 = vmatprep.subr.mxu0 0.0
    %518 = vmatpush1.msra.mxu0 0.0
    %519 = vmatprep.subr.mxu0 %v495
    %520 = vmatpush1.msra.mxu0 %v492
    %521 = vmatprep.subr.mxu0 %v490
    %522 = vmatpush1.msra.mxu0 %v489
    %523 = vmatprep.subr.mxu0 %v488
    %524 = vmatpush1.msra.mxu0 %v487
    %525 = vmatprep.subr.mxu0 %v486
    %526 = vmatpush1.msra.mxu0 %v485
    %527 = vmatprep.subr.mxu0 %v484
    %528 = vmatpush1.msra.mxu0 %v483
    %529 = vmatprep.subr.mxu0 0.0
    %530 = vmatpush2.msra.mxu0 0.0
    %531 = vmatprep.subr.mxu0 0.0
    %532 = vmatpush2.msra.mxu0 0.0
    %533 = vmatprep.subr.mxu0 0.0
    %534 = vmatpush2.msra.mxu0 0.0
    %535 = vmatprep.subr.mxu0 0.0
    %536 = vmatpush2.msra.mxu0 0.0
    %537 = vmatprep.subr.mxu0 0.0
    %538 = vmatpush2.msra.mxu0 0.0
    %539 = vmatprep.subr.mxu0 0.0
    %540 = vmatpush2.msra.mxu0 0.0
    %541 = vmatprep.subr.mxu0 0.0
    %542 = vmatpush2.msra.mxu0 0.0
    %543 = vmatprep.subr.mxu0 0.0
    %544 = vmatpush2.msra.mxu0 0.0
    %545 = vmatprep.subr.mxu0 0.0
    %546 = vmatpush2.msra.mxu0 0.0
    %547 = vmatprep.subr.mxu0 0.0
    %548 = vmatpush2.msra.mxu0 0.0
    %549 = vmatprep.subr.mxu0 0.0
    %550 = vmatpush2.msra.mxu0 0.0
    %551 = vmatprep.subr.mxu0 0.0
    %552 = vmatpush2.msra.mxu0 0.0
    %553 = vmatprep.subr.mxu0 0.0
    %554 = vmatpush2.msra.mxu0 0.0
    %555 = vmatprep.subr.mxu0 0.0
    %556 = vmatpush2.msra.mxu0 0.0
    %557 = vmatprep.subr.mxu0 0.0
    %558 = vmatpush2.msra.mxu0 0.0
    %559 = vmatprep.subr.mxu0 0.0
    %560 = vmatpush2.msra.mxu0 0.0
    %561 = vmatprep.mubr.f32.mxu0 0.0
    %562 = vmatmul.mubr.f32.gmra.mxu0 %v265
    %v563 = vpop.f32.mrf.mxu0
    %v564 = vadd.f32 %v262, %v563
    %v565 = vpop.f32.mrf.mxu0
    %v566 = vadd.f32 %v262, %v565
    %567 = vdwg.mxu0
    %v569 = vcombine.high %v30, %v30
    %s571 = scalar_lea.vmem %s3, 32
    %572 = vst [vmem:[%s571] sm:$0xf] %v30
    %573 = vst [vmem:[%s571 + $0x8] sm:$0xf] %v569
    %v576 = vrot.slane %v564, 4
    %v577 = vrot.slane %v566, 4
    %580 = vst [vmem:[%s571] sm:$0xf0] %v576
    %581 = vst [vmem:[%s571 + $0x8] sm:$0xf0] %v577
    %582 = vst [vmem:[%s571 + $0x10] sm:$0xf] %v576
    %583 = vst [vmem:[%s571 + $0x18] sm:$0xf] %v577
    // Predicated region
    $region18: #{tpu_custom_call.1} parent=1 // pred_check
      _
    $region19: #{tpu_custom_call.1} parent=1 // pred_check_branch
      %585 = sbr.rel (0) target = $region21
    $region20: #{tpu_custom_call.1} parent=1 // pred_region
      _
    $region21: #{tpu_custom_call.1} parent=1 // pred_fallthru
      _
    // Predicated region
    $region22: #{tpu_custom_call.1} parent=1 // pred_check
      _
    $region23: #{tpu_custom_call.1} parent=1 // pred_check_branch
      %587 = sbr.rel (0) target = $region25
    $region24: #{tpu_custom_call.1} parent=1 // pred_region
      _
    $region25: #{tpu_custom_call.1} parent=1 // pred_fallthru
      _
    %588 = vsyncpa [#allocation3], 1

</llo_original>
